<compile_context>
chip_gen: v5e
topology: v5e:2x2
jax: 0.10.0
libtpu: 0.0.40
codegen_flags: <defaults>
</compile_context>

<pallas_src>
import functools

import jax
import jax.numpy as jnp
from jax.experimental import pallas as pl
from jax.experimental.pallas import tpu as pltpu


def _cross_entropy_kernel(logits_ref, tgt_ref, out_ref, *, n_rows, tile_rows):
    """One batch tile: write the tile's summed NLL, broadcast over a (1,8,128) block."""
    i = pl.program_id(0)

    x = logits_ref[...]                                     # (TILE_N, C), input dtype
    tgt = tgt_ref[...]                                      # (TILE_N, 1), int32

    # Numerically stable shift in the input dtype; upcast only for exp/accumulate.
    row_max = jnp.max(x, axis=-1, keepdims=True)            # (TILE_N, 1)
    shifted = (x - row_max).astype(jnp.float32)             # (TILE_N, C) f32

    # log-sum-exp of the shifted logits (EUP exp + XLU lane reduce).
    sum_exp = jnp.sum(jnp.exp(shifted), axis=-1, keepdims=True)        # (TILE_N, 1)

    # Target logit via compare+select+reduce on shifted values
    # (lse - x[t] == log(sum_exp) - (x[t] - row_max); row_max cancels).
    col = jax.lax.broadcasted_iota(jnp.int32, shifted.shape, 1)        # (TILE_N, C)
    tgt_shifted = jnp.sum(jnp.where(col == tgt, shifted, 0.0),
                          axis=-1, keepdims=True)                      # (TILE_N, 1)

    loss_rows = jnp.log(sum_exp) - tgt_shifted                         # (TILE_N, 1)

    # Mask rows that are padding past the true batch size (tail tile).
    row_ids = jax.lax.broadcasted_iota(jnp.int32, (tile_rows, 1), 0) + i * tile_rows
    valid = row_ids < n_rows
    partial = jnp.sum(jnp.where(valid, loss_rows, 0.0))                # scalar f32

    out_ref[...] = jnp.zeros(out_ref.shape, jnp.float32) + partial


def _choose_tile_rows(n, c, itemsize):
    """Largest row tile whose double-buffered logits block stays a few MiB."""
    target_tile_bytes = 4 * 1024 * 1024            # ~4 MiB/block, ~8 MiB double-buffered
    tn = target_tile_bytes // max(1, c * itemsize)
    tn = max(8, min(int(tn), 1024))
    tn = (tn // 8) * 8                             # sublane-aligned
    n_pad8 = ((n + 7) // 8) * 8
    return max(8, min(tn, n_pad8))


def classify_loss(out_class, target_class, tile_rows=None):
    """Equivalent of ClassifyLoss().forward(outClass, targetClass).

    out_class:    (N, C) float logits
    target_class: (N,)   integer class indices
    returns:      scalar f32 mean cross-entropy loss
    """
    n, c = out_class.shape
    tgt = target_class.astype(jnp.int32).reshape(n, 1)

    if tile_rows is None:
        tile_rows = _choose_tile_rows(n, c, out_class.dtype.itemsize)
    tile_rows = max(8, (int(tile_rows) // 8) * 8)

    num_tiles = pl.cdiv(n, tile_rows)

    # Pad N so every block is fully in-bounds; padded rows are masked in-kernel.
    n_padded = num_tiles * tile_rows
    if n_padded != n:
        out_class = jnp.pad(out_class, ((0, n_padded - n), (0, 0)))
        tgt = jnp.pad(tgt, ((0, n_padded - n), (0, 0)))

    kernel = functools.partial(_cross_entropy_kernel, n_rows=n, tile_rows=tile_rows)

    partials = pl.pallas_call(
        kernel,
        out_shape=jax.ShapeDtypeStruct((num_tiles, 8, 128), jnp.float32),
        grid=(num_tiles,),
        in_specs=[
            # lane-dense logits tile, auto double-buffered by Pallas
            pl.BlockSpec((tile_rows, c), lambda i: (i, 0)),
            # (TILE_N, 1) int32 targets: lane padding accepted (tiny vs logits tile)
            pl.BlockSpec((tile_rows, 1), lambda i: (i, 0)),
        ],
        out_specs=pl.BlockSpec((1, 8, 128), lambda i: (i, 0, 0)),
        compiler_params=pltpu.CompilerParams(
            dimension_semantics=("parallel",),     # megacore-shardable on v7x
            vmem_limit_bytes=32 * 1024 * 1024,
        ),
        cost_estimate=pl.CostEstimate(
            flops=4 * n * c,
            transcendentals=n * c,
            bytes_accessed=n * c * out_class.dtype.itemsize + n * 4
                           + num_tiles * 8 * 128 * 4,
        ),
    )(out_class, tgt)

    # Tiny finalize outside the kernel: sum per-tile partials, divide by true N.
    return jnp.sum(partials[:, 0, 0]) / jnp.float32(n)


if __name__ == "__main__":
    key = jax.random.PRNGKey(0)
    k_logits, k_tgt = jax.random.split(key)

    # Small synthetic shapes: batch=20 (deliberately not a multiple of the tile), classes=32.
    N, C = 20, 32
    logits = jax.random.normal(k_logits, (N, C), dtype=jnp.float32)
    targets = jax.random.randint(k_tgt, (N,), 0, C, dtype=jnp.int32)

    loss = classify_loss(logits, targets)                     # auto tile size (single tile)
    loss_tiled = classify_loss(logits, targets, tile_rows=8)  # multi-tile + masked tail
    jax.block_until_ready((loss, loss_tiled))

    # Reference: same math as torch.nn.functional.cross_entropy (mean reduction).
    log_probs = jax.nn.log_softmax(logits.astype(jnp.float32), axis=-1)
    ref = -jnp.mean(log_probs[jnp.arange(N), targets])

    assert jnp.allclose(loss, ref, atol=1e-5, rtol=1e-5), (loss, ref)
    assert jnp.allclose(loss_tiled, ref, atol=1e-5, rtol=1e-5), (loss_tiled, ref)

    print("KERNEL_OK")
</pallas_src>

<mosaic_0001>
module attributes {stable_mosaic.version = 11 : i64} {
  func.func @_cross_entropy_kernel(%arg0: i32, %arg1: memref<24x32xf32, #tpu.memory_space<vmem>>, %arg2: memref<24x1xi32, #tpu.memory_space<vmem>>, %arg3: memref<1x8x128xf32, #tpu.memory_space<vmem>>) attributes {dimension_semantics = [#tpu.dimension_semantics<parallel>], iteration_bounds = array<i64: 1>, scalar_prefetch = 0 : i64, scratch_operands = 0 : i64, tpu.core_type = #tpu.core_type<tc>, window_params = [{transform_indices = @transform_0, window_bounds = array<i64: 24, 32>}, {transform_indices = @transform_1, window_bounds = array<i64: 24, 1>}, {transform_indices = @transform_2, window_bounds = array<i64: 1, 8, 128>}]} {
    %c0 = arith.constant 0 : index
    %c0_0 = arith.constant 0 : index
    %0 = vector.load %arg1[%c0, %c0_0] : memref<24x32xf32, #tpu.memory_space<vmem>>, vector<24x32xf32>
    %c0_1 = arith.constant 0 : index
    %c0_2 = arith.constant 0 : index
    %1 = vector.load %arg2[%c0_1, %c0_2] : memref<24x1xi32, #tpu.memory_space<vmem>>, vector<24x1xi32>
    %cst = arith.constant dense<0xFF800000> : vector<24xf32>
    %2 = vector.multi_reduction <maximumf>, %0, %cst [1] : vector<24x32xf32> to vector<24xf32>
    %3 = vector.shape_cast %2 : vector<24xf32> to vector<24x1xf32>
    %4 = vector.broadcast %3 : vector<24x1xf32> to vector<24x32xf32>
    %5 = arith.subf %0, %4 : vector<24x32xf32>
    %6 = math.exp %5 : vector<24x32xf32>
    %cst_3 = arith.constant dense<0.000000e+00> : vector<24xf32>
    %7 = vector.multi_reduction <add>, %6, %cst_3 [1] : vector<24x32xf32> to vector<24xf32>
    %8 = vector.shape_cast %7 : vector<24xf32> to vector<24x1xf32>
    %9 = tpu.iota {dimensions = array<i32: 1>} : vector<24x32xi32>
    %10 = vector.broadcast %1 : vector<24x1xi32> to vector<24x32xi32>
    %11 = arith.cmpi eq, %9, %10 : vector<24x32xi32>
    %cst_4 = arith.constant 0.000000e+00 : f32
    %12 = vector.broadcast %cst_4 : f32 to vector<24x32xf32>
    %13 = arith.select %11, %5, %12 : vector<24x32xi1>, vector<24x32xf32>
    %cst_5 = arith.constant dense<0.000000e+00> : vector<24xf32>
    %14 = vector.multi_reduction <add>, %13, %cst_5 [1] : vector<24x32xf32> to vector<24xf32>
    %15 = vector.shape_cast %14 : vector<24xf32> to vector<24x1xf32>
    %16 = math.log %8 : vector<24x1xf32>
    %17 = arith.subf %16, %15 : vector<24x1xf32>
    %18 = tpu.iota {dimensions = array<i32: 0>} : vector<24x1xi32>
    %c24_i32 = arith.constant 24 : i32
    %19 = arith.muli %arg0, %c24_i32 : i32
    %20 = vector.broadcast %19 : i32 to vector<24x1xi32>
    %21 = arith.addi %18, %20 : vector<24x1xi32>
    %c20_i32 = arith.constant 20 : i32
    %22 = vector.broadcast %c20_i32 : i32 to vector<24x1xi32>
    %23 = arith.cmpi slt, %21, %22 : vector<24x1xi32>
    %cst_6 = arith.constant 0.000000e+00 : f32
    %24 = vector.broadcast %cst_6 : f32 to vector<24x1xf32>
    %25 = arith.select %23, %17, %24 : vector<24x1xi1>, vector<24x1xf32>
    %26 = vector.shape_cast %25 : vector<24x1xf32> to vector<1x24x1xf32>
    %cst_7 = arith.constant dense<0.000000e+00> : vector<1xf32>
    %27 = vector.multi_reduction <add>, %26, %cst_7 [1, 2] : vector<1x24x1xf32> to vector<1xf32>
    %28 = vector.shape_cast %27 : vector<1xf32> to vector<1x1x1xf32>
    %29 = vector.extract %28[0, 0, 0] : f32 from vector<1x1x1xf32>
    %cst_8 = arith.constant 0.000000e+00 : f32
    %30 = vector.broadcast %cst_8 : f32 to vector<1x8x128xf32>
    %31 = vector.broadcast %29 : f32 to vector<1x8x128xf32>
    %32 = arith.addf %30, %31 : vector<1x8x128xf32>
    %c0_9 = arith.constant 0 : index
    %c0_10 = arith.constant 0 : index
    %c0_11 = arith.constant 0 : index
    %33 = vector.load %arg3[%c0_9, %c0_10, %c0_11] : memref<1x8x128xf32, #tpu.memory_space<vmem>>, vector<1x8x128xf32>
    tpu.vector_store %arg3[%c0_9, %c0_10, %c0_11], %32 {strides = array<i32>} : memref<1x8x128xf32, #tpu.memory_space<vmem>>, vector<1x8x128xf32>,
    return
  }
  func.func @transform_0(%arg0: i32) -> (i32, i32) {
    %c0_i32 = arith.constant 0 : i32
    %c0_i32_0 = arith.constant 0 : i32
    return %arg0, %c0_i32 : i32, i32
  }
  func.func @transform_1(%arg0: i32) -> (i32, i32) {
    %c0_i32 = arith.constant 0 : i32
    %c0_i32_0 = arith.constant 0 : i32
    return %arg0, %c0_i32 : i32, i32
  }
  func.func @transform_2(%arg0: i32) -> (i32, i32, i32) {
    %c0_i32 = arith.constant 0 : i32
    %c0_i32_0 = arith.constant 0 : i32
    %c0_i32_1 = arith.constant 0 : i32
    return %arg0, %c0_i32, %c0_i32_0 : i32, i32, i32
  }
}

</mosaic_0001>

<llo_original>
// kernel: tpu_custom_call.1
$region0: #{tpu_custom_call.1}
  #allocation0 [shape = 'u32[]', space=smem, size = 0x4, offset = 0x4, fixed_abs, tag = 'smem constant byte address 0x4 - core index']
  #allocation1 [shape = 'u32[72,128]{1,0:T(1,128)}', space=vmem, size = 0x9000, scoped, tag = 'internal scratch']
  %s0 = inlined_call_operand.vmem [shape: f32[24,32], index: 0, kind: input, shape index: {}]
  %s1 = inlined_call_operand.vmem [shape: s32[24,1], index: 1, kind: input, shape index: {}]
  %s2 = inlined_call_operand.hbm [shape: f32[1,8,128], index: 2, kind: output, shape index: {}]
  %s3 = sld [smem:[#allocation0]]
  $region18: #{tpu_custom_call.1} parent=0
    _
  %s5 = ssub.s32 1, %s3
  %s6 = scalar_select 0, %s5, %s3
  $region1: #{tpu_custom_call.1} parent=0
    #allocation2 [shape = 'u8[4096]{0}', space=vmem, size = 0x1000, scoped, tag = 'output window, operand 0, single buffered']
    #allocation3 [shape = 's32[1]{0}', space=sflag, size = 0x4, scoped, tag = 'scoped memory for tpu_custom_call.1']
    %7 = vsyncpa [#allocation3], 0
    // Predicated region
    $region2: #{tpu_custom_call.1} parent=1 // pred_check
      _
    $region3: #{tpu_custom_call.1} parent=1 // pred_check_branch
      %9 = sbr.rel (0) target = $region5
    $region4: #{tpu_custom_call.1} parent=1 // pred_region
      _
    $region5: #{tpu_custom_call.1} parent=1 // pred_fallthru
      _
    // Predicated region
    $region6: #{tpu_custom_call.1} parent=1 // pred_check
      _
    $region7: #{tpu_custom_call.1} parent=1 // pred_check_branch
      %11 = sbr.rel (0) target = $region9
    $region8: #{tpu_custom_call.1} parent=1 // pred_region
      _
    $region9: #{tpu_custom_call.1} parent=1 // pred_fallthru
      _
    %v12 = vld [vmem:[%s0] sm:$0xff]
    %v13 = vld [vmem:[%s0 + $0x8] sm:$0xff]
    %v14 = vld [vmem:[%s0 + $0x10] sm:$0xff]
    %v15 = vld [vmem:[%s1] sm:$0xff]
    %v16 = vld [vmem:[%s1 + $0x8] sm:$0xff]
    %v17 = vld [vmem:[%s1 + $0x10] sm:$0xff]
    %vm18 = vcmask 261120
    %v19 = vsel %vm18, %v12, -inf
    %20 = vmax.xlane.f32.xlu0 %v19
    %v21 = vpop.xlane.xlu0 %20
    %v22 = vsel %vm18, %v13, -inf
    %23 = vmax.xlane.f32.xlu0 %v22
    %v24 = vpop.xlane.xlu0 %23
    %v25 = vsel %vm18, %v14, -inf
    %26 = vmax.xlane.f32.xlu0 %v25
    %v27 = vpop.xlane.xlu0 %26
    %v28 = vsub.f32 %v12, %v21
    %v29 = vsub.f32 %v13, %v24
    %v30 = vsub.f32 %v14, %v27
    %v31 = vmul.f32 %v28, 1.442695
    %v32 = vpow.pop %v31
    %v33 = vmul.f32 %v29, 1.442695
    %v34 = vpow.pop %v33
    %v35 = vmul.f32 %v30, 1.442695
    %v36 = vpow.pop %v35
    %v37 = vsel %vm18, %v32, 0.0
    %38 = vadd.xlane.f32.xlu0 %v37
    %v39 = vpop.xlane.xlu0 %38
    %v40 = vsel %vm18, %v34, 0.0
    %41 = vadd.xlane.f32.xlu0 %v40
    %v42 = vpop.xlane.xlu0 %41
    %v43 = vsel %vm18, %v36, 0.0
    %44 = vadd.xlane.f32.xlu0 %v43
    %v45 = vpop.xlane.xlu0 %44
    %v46 = vlaneseq
    %v47 = vand.u32 %v46, 127
    %48 = vset.pattern.permute.xlu0 0
    %49 = vperm.xlu0 %48, %v15
    %v50 = vpop.permute.xlu0 %49
    %51 = vset.pattern.permute.xlu0 0
    %52 = vperm.xlu0 %51, %v16
    %v53 = vpop.permute.xlu0 %52
    %54 = vset.pattern.permute.xlu0 0
    %55 = vperm.xlu0 %54, %v17
    %v56 = vpop.permute.xlu0 %55
    %vm57 = vcmp.eq.s32.totalorder %v47, %v50
    %vm58 = vcmp.eq.s32.totalorder %v47, %v53
    %vm59 = vcmp.eq.s32.totalorder %v47, %v56
    %v60 = vsel %vm57, %v28, 0.0
    %v61 = vsel %vm58, %v29, 0.0
    %v62 = vsel %vm59, %v30, 0.0
    %v63 = vsel %vm18, %v60, 0.0
    %64 = vadd.xlane.f32.xlu0 %v63
    %v65 = vpop.xlane.xlu0 %64
    %v66 = vsel %vm18, %v61, 0.0
    %67 = vadd.xlane.f32.xlu0 %v66
    %v68 = vpop.xlane.xlu0 %67
    %v69 = vsel %vm18, %v62, 0.0
    %70 = vadd.xlane.f32.xlu0 %v69
    %v71 = vpop.xlane.xlu0 %70
    %v72 = vlog2.pop %v39
    %v73 = vmul.f32 %v72, 0.6931472
    %v74 = vlog2.pop %v42
    %v75 = vmul.f32 %v74, 0.6931472
    %v76 = vlog2.pop %v45
    %v77 = vmul.f32 %v76, 0.6931472
    %v78 = vsub.f32 %v73, %v65
    %v79 = vsub.f32 %v75, %v68
    %v80 = vsub.f32 %v77, %v71
    %v81 = vlaneseq
    %v82 = vshrl.u32 %v81, 7
    %v83 = vadd.s32 %v82, 8
    %v84 = vadd.s32 %v82, 16
    %s85 = smul.u32 0, 24
    %v86 = vstv %s85
    %v87 = vadd.s32 %v82, %v86
    %v88 = vadd.s32 %v83, %v86
    %v89 = vadd.s32 %v84, %v86
    %vm90 = vcmp.lt.s32.totalorder %v87, 20
    %vm91 = vcmp.lt.s32.totalorder %v88, 20
    %vm92 = vcmp.lt.s32.totalorder %v89, 20
    %v93 = vsel %vm90, %v78, 0.0
    %v94 = vsel %vm91, %v79, 0.0
    %v95 = vsel %vm92, %v80, 0.0
    %vm96 = vcmask 7168
    %v97 = vsel %vm96, %v93, 0.0
    %v98 = vsel %vm96, %v94, 0.0
    %v99 = vadd.f32 %v97, %v98
    %v100 = vsel %vm96, %v95, 0.0
    %v101 = vadd.f32 %v99, %v100
    %102 = vadd.xlane.f32.xlu0 %v101
    %v103 = vpop.xlane.xlu0 %102
    %v104 = vrot.slane %v103, 4
    %v105 = vadd.f32 %v103, %v104
    %v106 = vrot.slane %v105, 2
    %v107 = vadd.f32 %v105, %v106
    %v108 = vrot.slane %v107, 1
    %v109 = vadd.f32 %v107, %v108
    %s110 = vtos %v109
    %v111 = vstv %s110
    %v112 = vadd.f32 %v111, 0.0
    %113 = vst [vmem:[#allocation2] sm:$0xff] %v112
    // Predicated region
    $region10: #{tpu_custom_call.1} parent=1 // pred_check
      _
    $region11: #{tpu_custom_call.1} parent=1 // pred_check_branch
      %115 = sbr.rel (0) target = $region13
    $region12: #{tpu_custom_call.1} parent=1 // pred_region
      %117 = vsyncadd [#allocation3], 0
      %s119 = sshll.u32 [#allocation2], 4
      %s120 = int_to_ptr.vmem [resolvable:$true] %s119
      %s121 = sshll.u32 %s2, 4
      %s122 = int_to_ptr.hbm [resolvable:$true] %s121
      %124 = dma.vmem_to_hbm [thread:$0]  %s120, 128, %s122, [#allocation3]
    $region13: #{tpu_custom_call.1} parent=1 // pred_fallthru
      _
    // Predicated region
    $region14: #{tpu_custom_call.1} parent=1 // pred_check
      _
    $region15: #{tpu_custom_call.1} parent=1 // pred_check_branch
      %126 = sbr.rel (0) target = $region17
    $region16: #{tpu_custom_call.1} parent=1 // pred_region
      %128 = dma.done [#allocation3], 128
    $region17: #{tpu_custom_call.1} parent=1 // pred_fallthru
      _
    %129 = vsyncpa [#allocation3], 1

</llo_original>
